<compile_context>
chip_gen: v5e
topology: v5e:2x2
jax: 0.10.0
libtpu: 0.0.40
codegen_flags: <defaults>
</compile_context>

<pallas_src>
import functools

import jax
import jax.numpy as jnp
from jax.experimental import pallas as pl
from jax.experimental.pallas import tpu as pltpu


def _keep_threshold_u32(keep_prob: float) -> int:
    # uniform32 < threshold  <=>  U[0,1) < keep_prob
    return min(int(keep_prob * (1 << 32)), (1 << 32) - 1)


def _vmem_capacity_bytes() -> int:
    """Per-TensorCore VMEM capacity; conservative 64 MiB (v7x) fallback."""
    try:
        info = pltpu.get_tpu_info()
        for name in ("vmem_capacity_bytes", "vmem_bytes", "vmem_size_bytes"):
            cap = getattr(info, name, None)
            if cap:
                return int(cap)
    except Exception:
        pass
    return 64 * 1024 * 1024


def _pick_tiles(T: int, BHp: int, itemsize: int, target_bytes: int):
    """Pick (tt, tn). tt is a multiple of 8 or == T; tn a multiple of 128."""
    row_bytes = BHp * itemsize
    raw_tt = max(1, target_bytes // max(1, row_bytes))
    if raw_tt >= T:
        tt, tn = T, BHp
    elif raw_tt >= 8:
        tt, tn = min((raw_tt // 8) * 8, T), BHp
    else:
        # Rows are very wide: tile the lane axis too (multiple of 128).
        tt = T if T < 8 else 8
        tn = (target_bytes // (tt * itemsize) // 128) * 128
        tn = int(min(max(128, tn), BHp))

    # If everything collapsed into one big block, split it so the pipeline has
    # >= 2 steps (DMA/compute overlap; lets both v7x TensorCores get work).
    total_bytes = T * BHp * itemsize
    if tt == T and tn == BHp and total_bytes > (2 * 1024 * 1024):
        if T >= 16:
            parts = 4 if T >= 32 else 2
            tt = max(8, ((T // parts) // 8) * 8)
        elif BHp >= 256:
            parts = 4 if BHp >= 1024 else 2
            tn = max(128, ((BHp // parts) // 128) * 128)
    return tt, tn


def _locked_dropout_kernel(x_ref, bits_ref, o_ref, *, keep_prob):
    # bits_ref: (1, tn) uint32, identical for every time tile ("locked" mask).
    threshold = jnp.uint32(_keep_threshold_u32(keep_prob))
    scale = jnp.asarray(1.0 / keep_prob, dtype=o_ref.dtype)
    zero = jnp.zeros((), dtype=o_ref.dtype)
    m = jnp.where(bits_ref[...] < threshold, scale, zero)   # (1, tn), out dtype
    o_ref[...] = x_ref[...] * m                              # one in-dtype vmul


def locked_dropout(x, key, dropout_rate=0.5, training=True):
    """Pallas implementation of flair LockedDropout.forward.

    x:   (T, B, H) array.
    key: jax PRNG key used for the single (1, B, H) Bernoulli draw.
    """
    if (not training) or dropout_rate == 0.0:
        return x

    keep_prob = 1.0 - float(dropout_rate)
    T, B, H = x.shape
    BH = B * H
    BHp = ((BH + 127) // 128) * 128
    itemsize = x.dtype.itemsize

    # Lane-dense 2-D layout (T, B*H); pad lanes to a multiple of 128 so every
    # output store is an unmasked full-width vst (pad path only when needed).
    x2 = x.reshape(T, BH)
    bits = jax.random.bits(key, (1, BH), dtype=jnp.uint32)
    if BHp != BH:
        x2 = jnp.pad(x2, ((0, 0), (0, BHp - BH)))
        bits = jnp.pad(bits, ((0, 0), (0, BHp - BH)))

    # Per-generation block / VMEM budgets.
    vmem_cap = _vmem_capacity_bytes()
    target_block = (8 * 1024 * 1024 if vmem_cap >= 128 * 1024 * 1024
                    else 6 * 1024 * 1024)            # v5e/v6e : v7x
    tt, tn = _pick_tiles(T, BHp, itemsize, target_block)
    block_bytes = tt * tn * itemsize
    vmem_limit = max(16 * 1024 * 1024,
                     min(4 * block_bytes + 4 * 1024 * 1024, (3 * vmem_cap) // 4))

    grid = (pl.cdiv(BHp, tn), pl.cdiv(T, tt))        # lane tiles outer, time inner

    kernel = functools.partial(_locked_dropout_kernel, keep_prob=keep_prob)
    out2 = pl.pallas_call(
        kernel,
        out_shape=jax.ShapeDtypeStruct((T, BHp), x.dtype),
        grid=grid,
        in_specs=[
            pl.BlockSpec((tt, tn), lambda n, t: (t, n)),   # x slab
            pl.BlockSpec((1, tn), lambda n, t: (0, n)),    # mask bits: locked over time
        ],
        out_specs=pl.BlockSpec((tt, tn), lambda n, t: (t, n)),
        compiler_params=pltpu.CompilerParams(
            dimension_semantics=("parallel", "parallel"),
            vmem_limit_bytes=int(vmem_limit),
        ),
        cost_estimate=pl.CostEstimate(
            flops=T * BHp,
            transcendentals=0,
            bytes_accessed=2 * T * BHp * itemsize + 4 * BHp,
        ),
    )(x2, bits)

    if BHp != BH:
        out2 = out2[:, :BH]
    return out2.reshape(T, B, H)


if __name__ == "__main__":
    root = jax.random.PRNGKey(0)
    x_key, mask_key = jax.random.split(root)

    T, B, H = 8, 2, 32
    x = jax.random.normal(x_key, (T, B, H), dtype=jnp.float32)

    dropout_rate = 0.5
    keep_prob = 1.0 - dropout_rate

    out = locked_dropout(x, mask_key, dropout_rate=dropout_rate, training=True)
    out = jax.block_until_ready(out)

    # Pure-JAX reference using the same random draw the wrapper makes,
    # same in-dtype single-multiply formulation.
    bits = jax.random.bits(mask_key, (1, B * H), dtype=jnp.uint32)
    keep = (bits < jnp.uint32(_keep_threshold_u32(keep_prob))).reshape(1, B, H)
    scale = jnp.asarray(1.0 / keep_prob, dtype=x.dtype)
    expected = x * jnp.where(keep, scale, jnp.zeros((), x.dtype))

    assert jnp.allclose(out, expected, atol=1e-6, rtol=1e-6), "mismatch vs reference"

    # "Locked" property: dropped-element pattern identical at every timestep.
    dropped = (out == 0.0) & (x != 0.0)
    assert bool(jnp.all(dropped == dropped[0:1])), "mask not shared across time axis"

    # Eval mode / zero-rate are identity.
    assert jnp.array_equal(
        locked_dropout(x, mask_key, dropout_rate, training=False), x)
    assert jnp.array_equal(
        locked_dropout(x, mask_key, 0.0, training=True), x)

    print("KERNEL_OK")
</pallas_src>

<mosaic_0001>
module attributes {stable_mosaic.version = 11 : i64} {
  func.func @_locked_dropout_kernel(%arg0: i32, %arg1: i32, %arg2: memref<8x128xf32, #tpu.memory_space<vmem>>, %arg3: memref<1x128xi32, #tpu.memory_space<vmem>>, %arg4: memref<8x128xf32, #tpu.memory_space<vmem>>) attributes {dimension_semantics = [#tpu.dimension_semantics<parallel>, #tpu.dimension_semantics<parallel>], iteration_bounds = array<i64: 1, 1>, scalar_prefetch = 0 : i64, scratch_operands = 0 : i64, tpu.core_type = #tpu.core_type<tc>, window_params = [{transform_indices = @transform_0, window_bounds = array<i64: 8, 128>}, {transform_indices = @transform_1, window_bounds = array<i64: 1, 128>}, {transform_indices = @transform_2, window_bounds = array<i64: 8, 128>}]} {
    %c0 = arith.constant 0 : index
    %c0_0 = arith.constant 0 : index
    %0 = vector.load %arg3[%c0, %c0_0] : memref<1x128xi32, #tpu.memory_space<vmem>>, vector<1x128xi32>
    %c-2147483648_i32 = arith.constant -2147483648 : i32
    %1 = vector.broadcast %c-2147483648_i32 : i32 to vector<1x128xi32>
    %2 = arith.cmpi ult, %0, %1 : vector<1x128xi32>
    %cst = arith.constant 2.000000e+00 : f32
    %cst_1 = arith.constant 0.000000e+00 : f32
    %3 = vector.broadcast %cst : f32 to vector<1x128xf32>
    %4 = vector.broadcast %cst_1 : f32 to vector<1x128xf32>
    %5 = arith.select %2, %3, %4 : vector<1x128xi1>, vector<1x128xf32>
    %c0_2 = arith.constant 0 : index
    %c0_3 = arith.constant 0 : index
    %6 = vector.load %arg2[%c0_2, %c0_3] : memref<8x128xf32, #tpu.memory_space<vmem>>, vector<8x128xf32>
    %7 = vector.broadcast %5 : vector<1x128xf32> to vector<8x128xf32>
    %8 = arith.mulf %6, %7 : vector<8x128xf32>
    %c0_4 = arith.constant 0 : index
    %c0_5 = arith.constant 0 : index
    %9 = vector.load %arg4[%c0_4, %c0_5] : memref<8x128xf32, #tpu.memory_space<vmem>>, vector<8x128xf32>
    tpu.vector_store %arg4[%c0_4, %c0_5], %8 {strides = array<i32>} : memref<8x128xf32, #tpu.memory_space<vmem>>, vector<8x128xf32>,
    return
  }
  func.func @transform_0(%arg0: i32, %arg1: i32) -> (i32, i32) {
    %c0_i32 = arith.constant 0 : i32
    return %arg1, %arg0 : i32, i32
  }
  func.func @transform_1(%arg0: i32, %arg1: i32) -> (i32, i32) {
    %c0_i32 = arith.constant 0 : i32
    %c0_i32_0 = arith.constant 0 : i32
    return %c0_i32, %arg0 : i32, i32
  }
  func.func @transform_2(%arg0: i32, %arg1: i32) -> (i32, i32) {
    %c0_i32 = arith.constant 0 : i32
    return %arg1, %arg0 : i32, i32
  }
}

</mosaic_0001>

<llo_original>
// kernel: tpu_custom_call.1
$region0: #{tpu_custom_call.1}
  #allocation0 [shape = 'u32[]', space=smem, size = 0x4, offset = 0x4, fixed_abs, tag = 'smem constant byte address 0x4 - core index']
  #allocation1 [shape = 'u32[72,128]{1,0:T(1,128)}', space=vmem, size = 0x9000, scoped, tag = 'internal scratch']
  %s0 = inlined_call_operand.hbm [shape: f32[8,128], index: 0, kind: input, shape index: {}]
  %s1 = inlined_call_operand.hbm [shape: u32[1,128], index: 1, kind: input, shape index: {}]
  %s2 = inlined_call_operand.hbm [shape: f32[8,128], index: 2, kind: output, shape index: {}]
  %s3 = sld [smem:[#allocation0]]
  $region26: #{tpu_custom_call.1} parent=0
    _
  %s5 = ssub.s32 1, %s3
  %s6 = scalar_select 0, %s5, %s3
  $region1: #{tpu_custom_call.1} parent=0
    #allocation2 [shape = 'u8[4096]{0}', space=vmem, size = 0x1000, scoped, tag = 'input window, operand 0, single buffered']
    #allocation3 [shape = 's32[1]{0}', space=sflag, size = 0x4, scoped, tag = 'scoped memory for tpu_custom_call.1']
    #allocation4 [shape = 's32[1]{0}', space=sflag, size = 0x4, scoped, tag = 'scoped memory for tpu_custom_call.1']
    #allocation5 [shape = 'u8[512]{0}', space=vmem, size = 0x400, scoped, tag = 'input window, operand 1, single buffered']
    #allocation6 [shape = 's32[1]{0}', space=sflag, size = 0x4, scoped, tag = 'scoped memory for tpu_custom_call.1']
    #allocation7 [shape = 'u8[4096]{0}', space=vmem, size = 0x1000, scoped, tag = 'output window, operand 0, single buffered']
    %7 = vsyncpa [#allocation3], 0
    %8 = vsyncpa [#allocation6], 0
    %9 = vsyncpa [#allocation4], 0
    // Predicated region
    $region2: #{tpu_custom_call.1} parent=1 // pred_check
      _
    $region3: #{tpu_custom_call.1} parent=1 // pred_check_branch
      %11 = sbr.rel (0) target = $region5
    $region4: #{tpu_custom_call.1} parent=1 // pred_region
      %13 = vsyncadd [#allocation3], 0
      %s15 = sshll.u32 %s0, 4
      %s16 = int_to_ptr.hbm [resolvable:$true] %s15
      %s17 = sshll.u32 [#allocation2], 4
      %s18 = int_to_ptr.vmem [resolvable:$true] %s17
      %20 = dma.hbm_to_vmem [thread:$0]  %s16, 128, %s18, [#allocation3]
    $region5: #{tpu_custom_call.1} parent=1 // pred_fallthru
      _
    // Predicated region
    $region6: #{tpu_custom_call.1} parent=1 // pred_check
      _
    $region7: #{tpu_custom_call.1} parent=1 // pred_check_branch
      %22 = sbr.rel (0) target = $region9
    $region8: #{tpu_custom_call.1} parent=1 // pred_region
      %24 = vsyncadd [#allocation6], 0
      %s26 = sshll.u32 %s1, 4
      %s27 = int_to_ptr.hbm [resolvable:$true] %s26
      %s28 = sshll.u32 [#allocation5], 4
      %s29 = int_to_ptr.vmem [resolvable:$true] %s28
      %31 = dma.hbm_to_vmem [thread:$0]  %s27, 16, %s29, [#allocation6]
    $region9: #{tpu_custom_call.1} parent=1 // pred_fallthru
      _
    // Predicated region
    $region10: #{tpu_custom_call.1} parent=1 // pred_check
      _
    $region11: #{tpu_custom_call.1} parent=1 // pred_check_branch
      %33 = sbr.rel (0) target = $region13
    $region12: #{tpu_custom_call.1} parent=1 // pred_region
      %35 = dma.done [#allocation3], 128
    $region13: #{tpu_custom_call.1} parent=1 // pred_fallthru
      _
    // Predicated region
    $region14: #{tpu_custom_call.1} parent=1 // pred_check
      _
    $region15: #{tpu_custom_call.1} parent=1 // pred_check_branch
      %37 = sbr.rel (0) target = $region17
    $region16: #{tpu_custom_call.1} parent=1 // pred_region
      %39 = dma.done [#allocation6], 16
    $region17: #{tpu_custom_call.1} parent=1 // pred_fallthru
      _
    %v40 = vld [vmem:[#allocation5] sm:$0x1]
    %v41 = vadd.s32 %v40, 2147483648
    %vm43 = vcmp.lt.s32.totalorder %v41, 0
    %v44 = vsel %vm43, 2.0, 0.0
    %v45 = vld [vmem:[#allocation2] sm:$0xff]
    %v47 = vperm.slane %v44, 0
    %v49 = vmul.f32 %v45, %v47
    %50 = vst [vmem:[#allocation7] sm:$0xff] %v49
    // Predicated region
    $region18: #{tpu_custom_call.1} parent=1 // pred_check
      _
    $region19: #{tpu_custom_call.1} parent=1 // pred_check_branch
      %52 = sbr.rel (0) target = $region21
    $region20: #{tpu_custom_call.1} parent=1 // pred_region
      %54 = vsyncadd [#allocation4], 0
      %s56 = sshll.u32 [#allocation7], 4
      %s57 = int_to_ptr.vmem [resolvable:$true] %s56
      %s58 = sshll.u32 %s2, 4
      %s59 = int_to_ptr.hbm [resolvable:$true] %s58
      %61 = dma.vmem_to_hbm [thread:$0]  %s57, 128, %s59, [#allocation4]
    $region21: #{tpu_custom_call.1} parent=1 // pred_fallthru
      _
    // Predicated region
    $region22: #{tpu_custom_call.1} parent=1 // pred_check
      _
    $region23: #{tpu_custom_call.1} parent=1 // pred_check_branch
      %63 = sbr.rel (0) target = $region25
    $region24: #{tpu_custom_call.1} parent=1 // pred_region
      %65 = dma.done [#allocation4], 128
    $region25: #{tpu_custom_call.1} parent=1 // pred_fallthru
      _
    %66 = vsyncpa [#allocation3], 1
    %67 = vsyncpa [#allocation6], 1
    %68 = vsyncpa [#allocation4], 1

</llo_original>
